<compile_context>
chip_gen: v7x
topology: tpu7x:2x2x1
jax: 0.10.0
libtpu: 0.0.40
codegen_flags: <defaults>
</compile_context>

<pallas_src>
import jax
import jax.numpy as jnp
from jax.experimental import pallas as pl
from jax.experimental.pallas import tpu as pltpu

LANE = 128  # TPU lane width; also the padded hidden width.


def _round_up(n, m):
    return ((n + m - 1) // m) * m


def qnetwork_kernel(x_ref, w1_ref, b1_ref, w2_ref, b2_ref, o_ref):
    # fc1 + ReLU: MXU matmul with f32 accumulation, bias/ReLU in f32 (VPU).
    h = jnp.dot(x_ref[...], w1_ref[...], preferred_element_type=jnp.float32)
    h = jnp.maximum(h + b1_ref[...], 0.0)
    # fc2: feed the MXU in the weights' compute dtype (bf16 or f32).
    out = jnp.dot(h.astype(w2_ref.dtype), w2_ref[...],
                  preferred_element_type=jnp.float32)
    o_ref[...] = (out + b2_ref[...]).astype(o_ref.dtype)


def qnetwork_forward(x, w1, b1, w2, b2, *, block_b=2048,
                     compute_dtype=jnp.bfloat16):
    """QNetwork forward: relu(x @ w1 + b1) @ w2 + b2 (output in float32).

    x: [B, in], w1: [in, hidden], b1: [(1,)hidden], w2: [hidden, out],
    b2: [(1,)out].  `compute_dtype` controls the matmul-input dtype (bf16
    halves the dominant HBM traffic on the activation stream).
    """
    B, in_size = x.shape
    hidden, out_size = w2.shape
    b1 = b1.reshape(1, hidden)
    b2 = b2.reshape(1, out_size)

    # Lane-dense padded widths (hidden 64 -> 128, out 4 -> 128).
    h_pad = _round_up(hidden, LANE)
    out_pad = _round_up(out_size, LANE)

    # Batch tile: multiple of 128 rows, capped at block_b; pad B up to a
    # whole number of tiles.  Default keeps double-buffered tiles well under
    # the 32 MiB scoped-VMEM default (v7x-safe).
    tb = min(block_b, _round_up(B, LANE))
    bp = _round_up(B, tb)

    # One-shot parameter padding (zero columns/rows are exact no-ops for the
    # math: relu(0 + 0) * 0-rows contributes nothing).  Biases stay f32.
    w1p = jnp.pad(w1, ((0, 0), (0, h_pad - hidden))).astype(compute_dtype)
    b1p = jnp.pad(b1, ((0, 0), (0, h_pad - hidden))).astype(jnp.float32)
    w2p = jnp.pad(w2, ((0, h_pad - hidden), (0, out_pad - out_size))
                  ).astype(compute_dtype)
    b2p = jnp.pad(b2, ((0, 0), (0, out_pad - out_size))).astype(jnp.float32)
    xp = jnp.pad(x, ((0, bp - B), (0, 0))).astype(compute_dtype)

    grid = (bp // tb,)
    out = pl.pallas_call(
        qnetwork_kernel,
        out_shape=jax.ShapeDtypeStruct((bp, out_pad), jnp.float32),
        grid=grid,
        in_specs=[
            pl.BlockSpec((tb, in_size), lambda i: (i, 0)),      # x: tiled
            pl.BlockSpec((in_size, h_pad), lambda i: (0, 0)),   # w1: resident
            pl.BlockSpec((1, h_pad), lambda i: (0, 0)),         # b1: resident
            pl.BlockSpec((h_pad, out_pad), lambda i: (0, 0)),   # w2: resident
            pl.BlockSpec((1, out_pad), lambda i: (0, 0)),       # b2: resident
        ],
        out_specs=pl.BlockSpec((tb, out_pad), lambda i: (i, 0)),
        compiler_params=pltpu.CompilerParams(
            dimension_semantics=("parallel",)),
    )(xp, w1p, b1p, w2p, b2p)

    # Slice off batch + lane padding.
    return out[:B, :out_size]


def init_params(key, input_size, hidden, output_size):
    """Deterministic synthetic init (PyTorch-Linear-like uniform bounds)."""
    k1, k2, k3, k4 = jax.random.split(key, 4)
    bound1 = 1.0 / jnp.sqrt(input_size)
    bound2 = 1.0 / jnp.sqrt(hidden)
    w1 = jax.random.uniform(k1, (input_size, hidden), jnp.float32, -bound1, bound1)
    b1 = jax.random.uniform(k2, (1, hidden), jnp.float32, -bound1, bound1)
    w2 = jax.random.uniform(k3, (hidden, output_size), jnp.float32, -bound2, bound2)
    b2 = jax.random.uniform(k4, (1, output_size), jnp.float32, -bound2, bound2)
    return w1, b1, w2, b2


if __name__ == "__main__":
    key = jax.random.PRNGKey(0)
    batch, input_size, hidden, output_size = 2, 16, 64, 4

    kx, kp = jax.random.split(key)
    x = jax.random.normal(kx, (batch, input_size), jnp.float32)
    w1, b1, w2, b2 = init_params(kp, input_size, hidden, output_size)

    # f32 path: strict check against the pure-JAX reference forward pass.
    out_f32 = jax.block_until_ready(
        qnetwork_forward(x, w1, b1, w2, b2, compute_dtype=jnp.float32))
    ref_f32 = jnp.maximum(x @ w1 + b1, 0.0) @ w2 + b2
    assert out_f32.shape == (batch, output_size)
    assert jnp.allclose(out_f32, ref_f32, atol=1e-5, rtol=1e-5)

    # bf16-input path (HBM-traffic optimized): compare against a reference
    # computed with the same bf16-rounded operands and f32 accumulation.
    out_bf16 = jax.block_until_ready(
        qnetwork_forward(x, w1, b1, w2, b2, compute_dtype=jnp.bfloat16))
    x16 = x.astype(jnp.bfloat16)
    w116 = w1.astype(jnp.bfloat16)
    w216 = w2.astype(jnp.bfloat16)
    h_ref = jnp.maximum(
        jnp.dot(x16, w116, preferred_element_type=jnp.float32) + b1, 0.0)
    ref_bf16 = jnp.dot(h_ref.astype(jnp.bfloat16), w216,
                       preferred_element_type=jnp.float32) + b2
    assert out_bf16.shape == (batch, output_size)
    assert jnp.allclose(out_bf16, ref_bf16, atol=2e-2, rtol=2e-2)

    print("KERNEL_OK")
</pallas_src>

<mosaic_0001>
module attributes {stable_mosaic.version = 11 : i64} {
  func.func @qnetwork_kernel(%arg0: i32, %arg1: memref<128x16xf32, #tpu.memory_space<vmem>>, %arg2: memref<16x128xf32, #tpu.memory_space<vmem>>, %arg3: memref<1x128xf32, #tpu.memory_space<vmem>>, %arg4: memref<128x128xf32, #tpu.memory_space<vmem>>, %arg5: memref<1x128xf32, #tpu.memory_space<vmem>>, %arg6: memref<128x128xf32, #tpu.memory_space<vmem>>) attributes {dimension_semantics = [#tpu.dimension_semantics<parallel>], iteration_bounds = array<i64: 1>, scalar_prefetch = 0 : i64, scratch_operands = 0 : i64, tpu.core_type = #tpu.core_type<tc>, window_params = [{transform_indices = @transform_0, window_bounds = array<i64: 128, 16>}, {pipeline_mode = #tpu.pipeline_mode<synchronous>, transform_indices = @transform_1, window_bounds = array<i64: 16, 128>}, {pipeline_mode = #tpu.pipeline_mode<synchronous>, transform_indices = @transform_2, window_bounds = array<i64: 1, 128>}, {pipeline_mode = #tpu.pipeline_mode<synchronous>, transform_indices = @transform_3, window_bounds = array<i64: 128, 128>}, {pipeline_mode = #tpu.pipeline_mode<synchronous>, transform_indices = @transform_4, window_bounds = array<i64: 1, 128>}, {transform_indices = @transform_5, window_bounds = array<i64: 128, 128>}]} {
    %c0 = arith.constant 0 : index
    %c0_0 = arith.constant 0 : index
    %0 = vector.load %arg1[%c0, %c0_0] : memref<128x16xf32, #tpu.memory_space<vmem>>, vector<128x16xf32>
    %c0_1 = arith.constant 0 : index
    %c0_2 = arith.constant 0 : index
    %1 = vector.load %arg2[%c0_1, %c0_2] : memref<16x128xf32, #tpu.memory_space<vmem>>, vector<16x128xf32>
    %cst = arith.constant dense<0.000000e+00> : vector<128x128xf32>
    %2 = tpu.matmul %0, %1, %cst {dimension_numbers = #tpu.dot_dimension_numbers<[1], [0], [0], [1], [0, 0, 1, 1], [], []>} : vector<128x16xf32>, vector<16x128xf32>, vector<128x128xf32> -> vector<128x128xf32>
    %c0_3 = arith.constant 0 : index
    %c0_4 = arith.constant 0 : index
    %3 = vector.load %arg3[%c0_3, %c0_4] : memref<1x128xf32, #tpu.memory_space<vmem>>, vector<1x128xf32>
    %4 = vector.broadcast %3 : vector<1x128xf32> to vector<128x128xf32>
    %5 = arith.addf %2, %4 : vector<128x128xf32>
    %cst_5 = arith.constant 0.000000e+00 : f32
    %6 = vector.broadcast %cst_5 : f32 to vector<128x128xf32>
    %7 = arith.maximumf %5, %6 : vector<128x128xf32>
    %c0_6 = arith.constant 0 : index
    %c0_7 = arith.constant 0 : index
    %8 = vector.load %arg4[%c0_6, %c0_7] : memref<128x128xf32, #tpu.memory_space<vmem>>, vector<128x128xf32>
    %cst_8 = arith.constant dense<0.000000e+00> : vector<128x128xf32>
    %9 = tpu.matmul %7, %8, %cst_8 {dimension_numbers = #tpu.dot_dimension_numbers<[1], [0], [0], [1], [0, 0, 1, 1], [], []>} : vector<128x128xf32>, vector<128x128xf32>, vector<128x128xf32> -> vector<128x128xf32>
    %c0_9 = arith.constant 0 : index
    %c0_10 = arith.constant 0 : index
    %10 = vector.load %arg5[%c0_9, %c0_10] : memref<1x128xf32, #tpu.memory_space<vmem>>, vector<1x128xf32>
    %11 = vector.broadcast %10 : vector<1x128xf32> to vector<128x128xf32>
    %12 = arith.addf %9, %11 : vector<128x128xf32>
    %c0_11 = arith.constant 0 : index
    %c0_12 = arith.constant 0 : index
    %13 = vector.load %arg6[%c0_11, %c0_12] : memref<128x128xf32, #tpu.memory_space<vmem>>, vector<128x128xf32>
    tpu.vector_store %arg6[%c0_11, %c0_12], %12 {strides = array<i32>} : memref<128x128xf32, #tpu.memory_space<vmem>>, vector<128x128xf32>,
    return
  }
  func.func @transform_0(%arg0: i32) -> (i32, i32) {
    %c0_i32 = arith.constant 0 : i32
    %c0_i32_0 = arith.constant 0 : i32
    return %arg0, %c0_i32 : i32, i32
  }
  func.func @transform_1(%arg0: i32) -> (i32, i32) {
    %c0_i32 = arith.constant 0 : i32
    %c0_i32_0 = arith.constant 0 : i32
    %c0_i32_1 = arith.constant 0 : i32
    return %c0_i32, %c0_i32_0 : i32, i32
  }
  func.func @transform_2(%arg0: i32) -> (i32, i32) {
    %c0_i32 = arith.constant 0 : i32
    %c0_i32_0 = arith.constant 0 : i32
    %c0_i32_1 = arith.constant 0 : i32
    return %c0_i32, %c0_i32_0 : i32, i32
  }
  func.func @transform_3(%arg0: i32) -> (i32, i32) {
    %c0_i32 = arith.constant 0 : i32
    %c0_i32_0 = arith.constant 0 : i32
    %c0_i32_1 = arith.constant 0 : i32
    return %c0_i32, %c0_i32_0 : i32, i32
  }
  func.func @transform_4(%arg0: i32) -> (i32, i32) {
    %c0_i32 = arith.constant 0 : i32
    %c0_i32_0 = arith.constant 0 : i32
    %c0_i32_1 = arith.constant 0 : i32
    return %c0_i32, %c0_i32_0 : i32, i32
  }
  func.func @transform_5(%arg0: i32) -> (i32, i32) {
    %c0_i32 = arith.constant 0 : i32
    %c0_i32_0 = arith.constant 0 : i32
    return %arg0, %c0_i32 : i32, i32
  }
}

</mosaic_0001>

<llo_original>
// kernel: tpu_custom_call.1
$region0: #{tpu_custom_call.1}
  #allocation0 [shape = 'u32[]', space=smem, size = 0x4, offset = 0x4, fixed_abs, tag = 'smem constant byte address 0x4 - core index']
  #allocation1 [shape = 'u32[144,128]{1,0:T(1,128)}', space=vmem, size = 0x12000, scoped, tag = 'internal scratch']
  %s0 = inlined_call_operand.vmem [shape: f32[128,16], index: 0, kind: input, shape index: {}]
  %s1 = inlined_call_operand.vmem [shape: f32[16,128], index: 1, kind: input, shape index: {}]
  %s2 = inlined_call_operand.vmem [shape: f32[1,128], index: 2, kind: input, shape index: {}]
  %s3 = inlined_call_operand.vmem [shape: f32[128,128], index: 3, kind: input, shape index: {}]
  %s4 = inlined_call_operand.vmem [shape: f32[1,128], index: 4, kind: input, shape index: {}]
  %s5 = inlined_call_operand.hbm [shape: f32[128,128], index: 5, kind: output, shape index: {}]
  %s6 = sld [smem:[#allocation0]]
  $region30: #{tpu_custom_call.1} parent=0
    _
  %s8 = ssub.s32 1, %s6
  %s9 = scalar_select 0, %s8, %s6
  $region1: #{tpu_custom_call.1} parent=0
    #allocation2 [shape = 'u8[65536]{0}', space=vmem, size = 0x10000, scoped, tag = 'output window, operand 0, single buffered']
    #allocation3 [shape = 's32[1]{0}', space=sflag, size = 0x4, scoped, tag = 'scoped memory for tpu_custom_call.1']
    %10 = vsyncpa [#allocation3], 0
    // Predicated region
    $region2: #{tpu_custom_call.1} parent=1 // pred_check
      _
    $region3: #{tpu_custom_call.1} parent=1 // pred_check_branch
      %12 = sbr.rel (0) target = $region5
    $region4: #{tpu_custom_call.1} parent=1 // pred_region
      _
    $region5: #{tpu_custom_call.1} parent=1 // pred_fallthru
      _
    // Predicated region
    $region6: #{tpu_custom_call.1} parent=1 // pred_check
      _
    $region7: #{tpu_custom_call.1} parent=1 // pred_check_branch
      %14 = sbr.rel (0) target = $region9
    $region8: #{tpu_custom_call.1} parent=1 // pred_region
      _
    $region9: #{tpu_custom_call.1} parent=1 // pred_fallthru
      _
    // Predicated region
    $region10: #{tpu_custom_call.1} parent=1 // pred_check
      _
    $region11: #{tpu_custom_call.1} parent=1 // pred_check_branch
      %16 = sbr.rel (0) target = $region13
    $region12: #{tpu_custom_call.1} parent=1 // pred_region
      _
    $region13: #{tpu_custom_call.1} parent=1 // pred_fallthru
      _
    // Predicated region
    $region14: #{tpu_custom_call.1} parent=1 // pred_check
      _
    $region15: #{tpu_custom_call.1} parent=1 // pred_check_branch
      %18 = sbr.rel (0) target = $region17
    $region16: #{tpu_custom_call.1} parent=1 // pred_region
      _
    $region17: #{tpu_custom_call.1} parent=1 // pred_fallthru
      _
    // Predicated region
    $region18: #{tpu_custom_call.1} parent=1 // pred_check
      _
    $region19: #{tpu_custom_call.1} parent=1 // pred_check_branch
      %20 = sbr.rel (0) target = $region21
    $region20: #{tpu_custom_call.1} parent=1 // pred_region
      _
    $region21: #{tpu_custom_call.1} parent=1 // pred_fallthru
      _
    %v21 = vld [vmem:[%s0] sm:$0xff]
    %v22 = vld [vmem:[%s0 + $0x8] sm:$0xff]
    %v23 = vld [vmem:[%s0 + $0x10] sm:$0xff]
    %v24 = vld [vmem:[%s0 + $0x18] sm:$0xff]
    %v25 = vld [vmem:[%s0 + $0x20] sm:$0xff]
    %v26 = vld [vmem:[%s0 + $0x28] sm:$0xff]
    %v27 = vld [vmem:[%s0 + $0x30] sm:$0xff]
    %v28 = vld [vmem:[%s0 + $0x38] sm:$0xff]
    %v29 = vld [vmem:[%s0 + $0x40] sm:$0xff]
    %v30 = vld [vmem:[%s0 + $0x48] sm:$0xff]
    %v31 = vld [vmem:[%s0 + $0x50] sm:$0xff]
    %v32 = vld [vmem:[%s0 + $0x58] sm:$0xff]
    %v33 = vld [vmem:[%s0 + $0x60] sm:$0xff]
    %v34 = vld [vmem:[%s0 + $0x68] sm:$0xff]
    %v35 = vld [vmem:[%s0 + $0x70] sm:$0xff]
    %v36 = vld [vmem:[%s0 + $0x78] sm:$0xff]
    %v37 = vld [vmem:[%s1] sm:$0xff]
    %v38 = vld [vmem:[%s1 + $0x8] sm:$0xff]
    %v39 = vld [vmem:[%s2] sm:$0x1]
    %v41 = vlaneseq
    %v42 = vshrl.u32 %v41, 7
    %v43 = vsub.s32 0, %v42
    %v44 = vrot.slane %v39, %v43
    %vm46 = vcmask 130048
    %v48 = vsel %vm46, %v21, 0
    %v51 = vsel %vm46, %v22, 0
    %v54 = vsel %vm46, %v23, 0
    %v57 = vsel %vm46, %v24, 0
    %v60 = vsel %vm46, %v25, 0
    %v63 = vsel %vm46, %v26, 0
    %v66 = vsel %vm46, %v27, 0
    %v69 = vsel %vm46, %v28, 0
    %v72 = vsel %vm46, %v29, 0
    %v75 = vsel %vm46, %v30, 0
    %v78 = vsel %vm46, %v31, 0
    %v81 = vsel %vm46, %v32, 0
    %v84 = vsel %vm46, %v33, 0
    %v87 = vsel %vm46, %v34, 0
    %v90 = vsel %vm46, %v35, 0
    %v93 = vsel %vm46, %v36, 0
    %95 = vmatprep.subr.mxu0 0.0
    %96 = vmatpush1.msra.mxu0 %v37
    %97 = vmatprep.subr.mxu0 0.0
    %98 = vmatpush1.msra.mxu0 %v38
    %99 = vmatprep.subr.mxu0 0.0
    %100 = vmatpush1.msra.mxu0 0.0
    %101 = vmatprep.subr.mxu0 0.0
    %102 = vmatpush1.msra.mxu0 0.0
    %103 = vmatprep.subr.mxu0 0.0
    %104 = vmatpush1.msra.mxu0 0.0
    %105 = vmatprep.subr.mxu0 0.0
    %106 = vmatpush1.msra.mxu0 0.0
    %107 = vmatprep.subr.mxu0 0.0
    %108 = vmatpush1.msra.mxu0 0.0
    %109 = vmatprep.subr.mxu0 0.0
    %110 = vmatpush1.msra.mxu0 0.0
    %111 = vmatprep.subr.mxu0 0.0
    %112 = vmatpush1.msra.mxu0 0.0
    %113 = vmatprep.subr.mxu0 0.0
    %114 = vmatpush1.msra.mxu0 0.0
    %115 = vmatprep.subr.mxu0 0.0
    %116 = vmatpush1.msra.mxu0 0.0
    %117 = vmatprep.subr.mxu0 0.0
    %118 = vmatpush1.msra.mxu0 0.0
    %119 = vmatprep.subr.mxu0 0.0
    %120 = vmatpush1.msra.mxu0 0.0
    %121 = vmatprep.subr.mxu0 0.0
    %122 = vmatpush1.msra.mxu0 0.0
    %123 = vmatprep.subr.mxu0 0.0
    %124 = vmatpush1.msra.mxu0 0.0
    %125 = vmatprep.subr.mxu0 0.0
    %126 = vmatpush1.msra.mxu0 0.0
    %127 = vmatprep.subr.mxu0 0.0
    %128 = vmatpush1.msra.mxu0 0.0
    %129 = vmatprep.subr.mxu0 0.0
    %130 = vmatpush1.msra.mxu0 0.0
    %131 = vmatprep.subr.mxu0 0.0
    %132 = vmatpush1.msra.mxu0 0.0
    %133 = vmatprep.subr.mxu0 0.0
    %134 = vmatpush1.msra.mxu0 0.0
    %135 = vmatprep.subr.mxu0 0.0
    %136 = vmatpush1.msra.mxu0 0.0
    %137 = vmatprep.subr.mxu0 0.0
    %138 = vmatpush1.msra.mxu0 0.0
    %139 = vmatprep.subr.mxu0 0.0
    %140 = vmatpush1.msra.mxu0 0.0
    %141 = vmatprep.subr.mxu0 0.0
    %142 = vmatpush1.msra.mxu0 0.0
    %143 = vmatprep.subr.mxu0 0.0
    %144 = vmatpush1.msra.mxu0 0.0
    %145 = vmatprep.subr.mxu0 0.0
    %146 = vmatpush1.msra.mxu0 0.0
    %147 = vmatprep.subr.mxu0 0.0
    %148 = vmatpush1.msra.mxu0 0.0
    %149 = vmatprep.subr.mxu0 0.0
    %150 = vmatpush1.msra.mxu0 0.0
    %151 = vmatprep.subr.mxu0 0.0
    %152 = vmatpush1.msra.mxu0 0.0
    %153 = vmatprep.subr.mxu0 0.0
    %154 = vmatpush1.msra.mxu0 0.0
    %155 = vmatprep.subr.mxu0 0.0
    %156 = vmatpush1.msra.mxu0 0.0
    %157 = vmatprep.subr.mxu0 0.0
    %158 = vmatpush1.msra.mxu0 0.0
    %159 = vmatprep.mubr.f32.mxu0 0.0
    %160 = vmatmul.mubr.f32.gmra.mrb[0].mxu0 %v48
    %v161 = vpop.f32.mrb[0].mxu0
    %v162 = vadd.f32 %v44, %v161
    %v163 = vpop.f32.mrb[0].mxu0
    %164 = vmatprep.mubr.f32.mxu0 0.0
    %165 = vmatmul.mubr.f32.gmra.mrb[0].mxu0 %v51
    %v166 = vpop.f32.mrb[0].mxu0
    %v167 = vadd.f32 %v44, %v166
    %v168 = vpop.f32.mrb[0].mxu0
    %169 = vmatprep.mubr.f32.mxu0 0.0
    %170 = vmatmul.mubr.f32.gmra.mrb[0].mxu0 %v54
    %v171 = vpop.f32.mrb[0].mxu0
    %v172 = vadd.f32 %v44, %v171
    %v173 = vpop.f32.mrb[0].mxu0
    %174 = vmatprep.mubr.f32.mxu0 0.0
    %175 = vmatmul.mubr.f32.gmra.mrb[0].mxu0 %v57
    %v176 = vpop.f32.mrb[0].mxu0
    %v177 = vadd.f32 %v44, %v176
    %v178 = vpop.f32.mrb[0].mxu0
    %179 = vmatprep.mubr.f32.mxu0 0.0
    %180 = vmatmul.mubr.f32.gmra.mrb[0].mxu0 %v60
    %v181 = vpop.f32.mrb[0].mxu0
    %v182 = vadd.f32 %v44, %v181
    %v183 = vpop.f32.mrb[0].mxu0
    %184 = vmatprep.mubr.f32.mxu0 0.0
    %185 = vmatmul.mubr.f32.gmra.mrb[0].mxu0 %v63
    %v186 = vpop.f32.mrb[0].mxu0
    %v187 = vadd.f32 %v44, %v186
    %v188 = vpop.f32.mrb[0].mxu0
    %189 = vmatprep.mubr.f32.mxu0 0.0
    %190 = vmatmul.mubr.f32.gmra.mrb[0].mxu0 %v66
    %v191 = vpop.f32.mrb[0].mxu0
    %v192 = vadd.f32 %v44, %v191
    %v193 = vpop.f32.mrb[0].mxu0
    %194 = vmatprep.mubr.f32.mxu0 0.0
    %195 = vmatmul.mubr.f32.gmra.mrb[0].mxu0 %v69
    %v196 = vpop.f32.mrb[0].mxu0
    %v197 = vadd.f32 %v44, %v196
    %v198 = vpop.f32.mrb[0].mxu0
    %199 = vmatprep.mubr.f32.mxu0 0.0
    %200 = vmatmul.mubr.f32.gmra.mrb[0].mxu0 %v72
    %v201 = vpop.f32.mrb[0].mxu0
    %v202 = vadd.f32 %v44, %v201
    %v203 = vpop.f32.mrb[0].mxu0
    %204 = vmatprep.mubr.f32.mxu0 0.0
    %205 = vmatmul.mubr.f32.gmra.mrb[0].mxu0 %v75
    %v206 = vpop.f32.mrb[0].mxu0
    %v207 = vadd.f32 %v44, %v206
    %v208 = vpop.f32.mrb[0].mxu0
    %209 = vmatprep.mubr.f32.mxu0 0.0
    %210 = vmatmul.mubr.f32.gmra.mrb[0].mxu0 %v78
    %v211 = vpop.f32.mrb[0].mxu0
    %v212 = vadd.f32 %v44, %v211
    %v213 = vpop.f32.mrb[0].mxu0
    %214 = vmatprep.mubr.f32.mxu0 0.0
    %215 = vmatmul.mubr.f32.gmra.mrb[0].mxu0 %v81
    %v216 = vpop.f32.mrb[0].mxu0
    %v217 = vadd.f32 %v44, %v216
    %v218 = vpop.f32.mrb[0].mxu0
    %219 = vmatprep.mubr.f32.mxu0 0.0
    %220 = vmatmul.mubr.f32.gmra.mrb[0].mxu0 %v84
    %v221 = vpop.f32.mrb[0].mxu0
    %v222 = vadd.f32 %v44, %v221
    %v223 = vpop.f32.mrb[0].mxu0
    %224 = vmatprep.mubr.f32.mxu0 0.0
    %225 = vmatmul.mubr.f32.gmra.mrb[0].mxu0 %v87
    %v226 = vpop.f32.mrb[0].mxu0
    %v227 = vadd.f32 %v44, %v226
    %v228 = vpop.f32.mrb[0].mxu0
    %229 = vmatprep.mubr.f32.mxu0 0.0
    %230 = vmatmul.mubr.f32.gmra.mrb[0].mxu0 %v90
    %v231 = vpop.f32.mrb[0].mxu0
    %v232 = vadd.f32 %v44, %v231
    %v233 = vpop.f32.mrb[0].mxu0
    %234 = vmatprep.mubr.f32.mxu0 0.0
    %235 = vmatmul.mubr.f32.gmra.mrb[0].mxu0 %v93
    %v236 = vpop.f32.mrb[0].mxu0
    %v237 = vadd.f32 %v44, %v236
    %v238 = vpop.f32.mrb[0].mxu0
    %239 = vdwg.mxu0
    %v240 = vmax.f32 %v162, 0.0
    %v241 = vmax.f32 %v167, 0.0
    %v242 = vmax.f32 %v172, 0.0
    %v243 = vmax.f32 %v177, 0.0
    %v244 = vmax.f32 %v182, 0.0
    %v245 = vmax.f32 %v187, 0.0
    %v246 = vmax.f32 %v192, 0.0
    %v247 = vmax.f32 %v197, 0.0
    %v248 = vmax.f32 %v202, 0.0
    %v249 = vmax.f32 %v207, 0.0
    %v250 = vmax.f32 %v212, 0.0
    %v251 = vmax.f32 %v217, 0.0
    %v252 = vmax.f32 %v222, 0.0
    %v253 = vmax.f32 %v227, 0.0
    %v254 = vmax.f32 %v232, 0.0
    %v255 = vmax.f32 %v237, 0.0
    %v256 = vld [vmem:[%s3] sm:$0xff]
    %v257 = vld [vmem:[%s3 + $0x8] sm:$0xff]
    %v258 = vld [vmem:[%s3 + $0x10] sm:$0xff]
    %v259 = vld [vmem:[%s3 + $0x18] sm:$0xff]
    %v260 = vld [vmem:[%s3 + $0x20] sm:$0xff]
    %v261 = vld [vmem:[%s3 + $0x28] sm:$0xff]
    %v262 = vld [vmem:[%s3 + $0x30] sm:$0xff]
    %v263 = vld [vmem:[%s3 + $0x38] sm:$0xff]
    %v264 = vld [vmem:[%s3 + $0x40] sm:$0xff]
    %v265 = vld [vmem:[%s3 + $0x48] sm:$0xff]
    %v266 = vld [vmem:[%s3 + $0x50] sm:$0xff]
    %v267 = vld [vmem:[%s3 + $0x58] sm:$0xff]
    %v268 = vld [vmem:[%s3 + $0x60] sm:$0xff]
    %v269 = vld [vmem:[%s3 + $0x68] sm:$0xff]
    %v270 = vld [vmem:[%s3 + $0x70] sm:$0xff]
    %v271 = vld [vmem:[%s3 + $0x78] sm:$0xff]
    %v272 = vld [vmem:[%s4] sm:$0x1]
    %v274 = vlaneseq
    %v275 = vshrl.u32 %v274, 7
    %v276 = vsub.s32 0, %v275
    %v277 = vrot.slane %v272, %v276
    %279 = vmatprep.subr.mxu0 0.0
    %280 = vmatpush1.msra.mxu0 %v256
    %281 = vmatprep.subr.mxu0 0.0
    %282 = vmatpush1.msra.mxu0 %v257
    %283 = vmatprep.subr.mxu0 0.0
    %284 = vmatpush1.msra.mxu0 %v258
    %285 = vmatprep.subr.mxu0 0.0
    %286 = vmatpush1.msra.mxu0 %v259
    %287 = vmatprep.subr.mxu0 0.0
    %288 = vmatpush1.msra.mxu0 %v260
    %289 = vmatprep.subr.mxu0 0.0
    %290 = vmatpush1.msra.mxu0 %v261
    %291 = vmatprep.subr.mxu0 0.0
    %292 = vmatpush1.msra.mxu0 %v262
    %293 = vmatprep.subr.mxu0 0.0
    %294 = vmatpush1.msra.mxu0 %v263
    %295 = vmatprep.subr.mxu0 0.0
    %296 = vmatpush1.msra.mxu0 %v264
    %297 = vmatprep.subr.mxu0 0.0
    %298 = vmatpush1.msra.mxu0 %v265
    %299 = vmatprep.subr.mxu0 0.0
    %300 = vmatpush1.msra.mxu0 %v266
    %301 = vmatprep.subr.mxu0 0.0
    %302 = vmatpush1.msra.mxu0 %v267
    %303 = vmatprep.subr.mxu0 0.0
    %304 = vmatpush1.msra.mxu0 %v268
    %305 = vmatprep.subr.mxu0 0.0
    %306 = vmatpush1.msra.mxu0 %v269
    %307 = vmatprep.subr.mxu0 0.0
    %308 = vmatpush1.msra.mxu0 %v270
    %309 = vmatprep.subr.mxu0 0.0
    %310 = vmatpush1.msra.mxu0 %v271
    %311 = vmatprep.subr.mxu0 0.0
    %312 = vmatpush1.msra.mxu0 0.0
    %313 = vmatprep.subr.mxu0 0.0
    %314 = vmatpush1.msra.mxu0 0.0
    %315 = vmatprep.subr.mxu0 0.0
    %316 = vmatpush1.msra.mxu0 0.0
    %317 = vmatprep.subr.mxu0 0.0
    %318 = vmatpush1.msra.mxu0 0.0
    %319 = vmatprep.subr.mxu0 0.0
    %320 = vmatpush1.msra.mxu0 0.0
    %321 = vmatprep.subr.mxu0 0.0
    %322 = vmatpush1.msra.mxu0 0.0
    %323 = vmatprep.subr.mxu0 0.0
    %324 = vmatpush1.msra.mxu0 0.0
    %325 = vmatprep.subr.mxu0 0.0
    %326 = vmatpush1.msra.mxu0 0.0
    %327 = vmatprep.subr.mxu0 0.0
    %328 = vmatpush1.msra.mxu0 0.0
    %329 = vmatprep.subr.mxu0 0.0
    %330 = vmatpush1.msra.mxu0 0.0
    %331 = vmatprep.subr.mxu0 0.0
    %332 = vmatpush1.msra.mxu0 0.0
    %333 = vmatprep.subr.mxu0 0.0
    %334 = vmatpush1.msra.mxu0 0.0
    %335 = vmatprep.subr.mxu0 0.0
    %336 = vmatpush1.msra.mxu0 0.0
    %337 = vmatprep.subr.mxu0 0.0
    %338 = vmatpush1.msra.mxu0 0.0
    %339 = vmatprep.subr.mxu0 0.0
    %340 = vmatpush1.msra.mxu0 0.0
    %341 = vmatprep.subr.mxu0 0.0
    %342 = vmatpush1.msra.mxu0 0.0
    %343 = vmatprep.mubr.f32.mxu0 0.0
    %344 = vmatmul.mubr.f32.gmra.mrb[0].mxu0 %v240
    %v345 = vpop.f32.mrb[0].mxu0
    %v346 = vadd.f32 %v277, %v345
    %v347 = vpop.f32.mrb[0].mxu0
    %348 = vmatprep.mubr.f32.mxu0 0.0
    %349 = vmatmul.mubr.f32.gmra.mrb[0].mxu0 %v241
    %v350 = vpop.f32.mrb[0].mxu0
    %v351 = vadd.f32 %v277, %v350
    %v352 = vpop.f32.mrb[0].mxu0
    %353 = vmatprep.mubr.f32.mxu0 0.0
    %354 = vmatmul.mubr.f32.gmra.mrb[0].mxu0 %v242
    %v355 = vpop.f32.mrb[0].mxu0
    %v356 = vadd.f32 %v277, %v355
    %v357 = vpop.f32.mrb[0].mxu0
    %358 = vmatprep.mubr.f32.mxu0 0.0
    %359 = vmatmul.mubr.f32.gmra.mrb[0].mxu0 %v243
    %v360 = vpop.f32.mrb[0].mxu0
    %v361 = vadd.f32 %v277, %v360
    %v362 = vpop.f32.mrb[0].mxu0
    %363 = vmatprep.mubr.f32.mxu0 0.0
    %364 = vmatmul.mubr.f32.gmra.mrb[0].mxu0 %v244
    %v365 = vpop.f32.mrb[0].mxu0
    %v366 = vadd.f32 %v277, %v365
    %v367 = vpop.f32.mrb[0].mxu0
    %368 = vmatprep.mubr.f32.mxu0 0.0
    %369 = vmatmul.mubr.f32.gmra.mrb[0].mxu0 %v245
    %v370 = vpop.f32.mrb[0].mxu0
    %v371 = vadd.f32 %v277, %v370
    %v372 = vpop.f32.mrb[0].mxu0
    %373 = vmatprep.mubr.f32.mxu0 0.0
    %374 = vmatmul.mubr.f32.gmra.mrb[0].mxu0 %v246
    %v375 = vpop.f32.mrb[0].mxu0
    %v376 = vadd.f32 %v277, %v375
    %v377 = vpop.f32.mrb[0].mxu0
    %378 = vmatprep.mubr.f32.mxu0 0.0
    %379 = vmatmul.mubr.f32.gmra.mrb[0].mxu0 %v247
    %v380 = vpop.f32.mrb[0].mxu0
    %v381 = vadd.f32 %v277, %v380
    %v382 = vpop.f32.mrb[0].mxu0
    %383 = vmatprep.mubr.f32.mxu0 0.0
    %384 = vmatmul.mubr.f32.gmra.mrb[0].mxu0 %v248
    %v385 = vpop.f32.mrb[0].mxu0
    %v386 = vadd.f32 %v277, %v385
    %v387 = vpop.f32.mrb[0].mxu0
    %388 = vmatprep.mubr.f32.mxu0 0.0
    %389 = vmatmul.mubr.f32.gmra.mrb[0].mxu0 %v249
    %v390 = vpop.f32.mrb[0].mxu0
    %v391 = vadd.f32 %v277, %v390
    %v392 = vpop.f32.mrb[0].mxu0
    %393 = vmatprep.mubr.f32.mxu0 0.0
    %394 = vmatmul.mubr.f32.gmra.mrb[0].mxu0 %v250
    %v395 = vpop.f32.mrb[0].mxu0
    %v396 = vadd.f32 %v277, %v395
    %v397 = vpop.f32.mrb[0].mxu0
    %398 = vmatprep.mubr.f32.mxu0 0.0
    %399 = vmatmul.mubr.f32.gmra.mrb[0].mxu0 %v251
    %v400 = vpop.f32.mrb[0].mxu0
    %v401 = vadd.f32 %v277, %v400
    %v402 = vpop.f32.mrb[0].mxu0
    %403 = vmatprep.mubr.f32.mxu0 0.0
    %404 = vmatmul.mubr.f32.gmra.mrb[0].mxu0 %v252
    %v405 = vpop.f32.mrb[0].mxu0
    %v406 = vadd.f32 %v277, %v405
    %v407 = vpop.f32.mrb[0].mxu0
    %408 = vmatprep.mubr.f32.mxu0 0.0
    %409 = vmatmul.mubr.f32.gmra.mrb[0].mxu0 %v253
    %v410 = vpop.f32.mrb[0].mxu0
    %v411 = vadd.f32 %v277, %v410
    %v412 = vpop.f32.mrb[0].mxu0
    %413 = vmatprep.mubr.f32.mxu0 0.0
    %414 = vmatmul.mubr.f32.gmra.mrb[0].mxu0 %v254
    %v415 = vpop.f32.mrb[0].mxu0
    %v416 = vadd.f32 %v277, %v415
    %v417 = vpop.f32.mrb[0].mxu0
    %418 = vmatprep.mubr.f32.mxu0 0.0
    %419 = vmatmul.mubr.f32.gmra.mrb[0].mxu0 %v255
    %v420 = vpop.f32.mrb[0].mxu0
    %v421 = vadd.f32 %v277, %v420
    %v422 = vpop.f32.mrb[0].mxu0
    %423 = vdwg.mxu0
    %424 = vst [vmem:[#allocation2] sm:$0xff] %v346
    %425 = vst [vmem:[#allocation2 + $0x8] sm:$0xff] %v351
    %426 = vst [vmem:[#allocation2 + $0x10] sm:$0xff] %v356
    %427 = vst [vmem:[#allocation2 + $0x18] sm:$0xff] %v361
    %428 = vst [vmem:[#allocation2 + $0x20] sm:$0xff] %v366
    %429 = vst [vmem:[#allocation2 + $0x28] sm:$0xff] %v371
    %430 = vst [vmem:[#allocation2 + $0x30] sm:$0xff] %v376
    %431 = vst [vmem:[#allocation2 + $0x38] sm:$0xff] %v381
    %432 = vst [vmem:[#allocation2 + $0x40] sm:$0xff] %v386
    %433 = vst [vmem:[#allocation2 + $0x48] sm:$0xff] %v391
    %434 = vst [vmem:[#allocation2 + $0x50] sm:$0xff] %v396
    %435 = vst [vmem:[#allocation2 + $0x58] sm:$0xff] %v401
    %436 = vst [vmem:[#allocation2 + $0x60] sm:$0xff] %v406
    %437 = vst [vmem:[#allocation2 + $0x68] sm:$0xff] %v411
    %438 = vst [vmem:[#allocation2 + $0x70] sm:$0xff] %v416
    %439 = vst [vmem:[#allocation2 + $0x78] sm:$0xff] %v421
    // Predicated region
    $region22: #{tpu_custom_call.1} parent=1 // pred_check
      _
    $region23: #{tpu_custom_call.1} parent=1 // pred_check_branch
      %441 = sbr.rel (0) target = $region25
    $region24: #{tpu_custom_call.1} parent=1 // pred_region
      %s443 = ssub.s32 2048, 2048
      %444 = vsyncadd [#allocation3], %s443
      %s445 = sshll.u32 [#allocation2], 4
      %s446 = int_to_ptr.vmem [resolvable:$true] %s445
      %451 = dma.vmem_to_hbm [thread:$0]  %s446, 2048, %s5, [#allocation3], 128, 128, 8
    $region25: #{tpu_custom_call.1} parent=1 // pred_fallthru
      _
    // Predicated region
    $region26: #{tpu_custom_call.1} parent=1 // pred_check
      _
    $region27: #{tpu_custom_call.1} parent=1 // pred_check_branch
      %453 = sbr.rel (0) target = $region29
    $region28: #{tpu_custom_call.1} parent=1 // pred_region
      %454 = dma.done [#allocation3], 2048
    $region29: #{tpu_custom_call.1} parent=1 // pred_fallthru
      _
    %455 = vsyncpa [#allocation3], 1

</llo_original>
